<compile_context>
chip_gen: v7x
topology: tpu7x:2x2x1
jax: 0.10.0
libtpu: 0.0.40
codegen_flags: <defaults>
</compile_context>

<pallas_src>
import functools

import jax
import jax.numpy as jnp
from jax.experimental import pallas as pl
from jax.experimental.pallas import tpu as pltpu


def _round_up(v: int, m: int) -> int:
    return ((v + m - 1) // m) * m


def _mlp_kernel(x_ref, w1_ref, b1_ref, w2_ref, b2_ref, w3_ref, b3_ref, o_ref):
    # f32 -> bf16 cast on the VPU (free: kernel is HBM-bound, VALU has slack).
    x = x_ref[...].astype(jnp.bfloat16)                       # (TILE_B, D)
    # Layer 1: Linear(input_dim, 64) + ReLU (f32 accumulation on the MXU).
    h1 = jnp.dot(x, w1_ref[...], preferred_element_type=jnp.float32) + b1_ref[...]
    h1 = jnp.maximum(h1, 0.0)
    # Dropout(p=0.1) -> identity in eval/inference mode.
    # TODO(synk): training-mode dropout would need pltpu.prng_* masking.
    # Layer 2: Linear(64, 32) + ReLU.
    h2 = jnp.dot(h1.astype(jnp.bfloat16), w2_ref[...],
                 preferred_element_type=jnp.float32) + b2_ref[...]
    h2 = jnp.maximum(h2, 0.0)
    # Layer 3: Linear(32, num_classes). Narrow (masked) store is fine here --
    # it minimizes output writeback and the kernel is HBM-bound, not vst-bound.
    out = jnp.dot(h2.astype(jnp.bfloat16), w3_ref[...],
                  preferred_element_type=jnp.float32) + b3_ref[...]
    o_ref[...] = out.astype(o_ref.dtype)


def prepare_params(params):
    """One-time parameter prep, hoisted out of the per-call forward path.

    Weights: (in_features, out_features) (transpose of PyTorch), cast to bf16
    for the MXU. Biases: f32, reshaped to (1, out) so they add directly to the
    f32 accumulators.
    """
    w1, b1, w2, b2, w3, b3 = params
    return (
        w1.astype(jnp.bfloat16), b1.reshape(1, -1).astype(jnp.float32),
        w2.astype(jnp.bfloat16), b2.reshape(1, -1).astype(jnp.float32),
        w3.astype(jnp.bfloat16), b3.reshape(1, -1).astype(jnp.float32),
    )


def _choose_tile_b(batch, input_dim, num_classes):
    # VMEM-aware cap: 3x-buffered f32 x blocks + double-buffered f32 out
    # blocks, kept well inside the smallest scoped-VMEM default (v5e: 16 MiB).
    budget = 12 * 1024 * 1024
    per_row = 3 * input_dim * 4 + 2 * num_classes * 4
    cap = max(8, min(2048, (budget // max(per_row, 1)) // 8 * 8))
    # Target >= 2 grid steps (v7x dual-TensorCore sharding) and bound the
    # padded waste of the partial last block.
    half = _round_up(max(1, -(-batch // 2)), 8)
    return max(8, min(cap, half))


@functools.partial(jax.jit, static_argnames=("tile_b",))
def domain_classifier_forward(x, prepared_params, *, tile_b=None):
    """Fused MLP forward. x: (B, input_dim) f32 -> (B, num_classes) f32."""
    w1, b1, w2, b2, w3, b3 = prepared_params
    B, input_dim = x.shape
    h1_dim = w1.shape[1]
    h2_dim = w2.shape[1]
    num_classes = w3.shape[1]

    if tile_b is None:
        tile_b = _choose_tile_b(B, input_dim, num_classes)
    tile_b = max(8, _round_up(int(tile_b), 8))    # enforce (8,128) sublane rule
    num_tiles = pl.cdiv(B, tile_b)                # partial last block is masked

    # Streamed x: 3-deep multi-buffering when the grid is long enough to
    # benefit (hides DMA latency behind the tiny per-tile compute).
    if num_tiles >= 3:
        x_spec = pl.BlockSpec((tile_b, input_dim), lambda i: (i, 0),
                              pipeline_mode=pl.Buffered(3))
    else:
        x_spec = pl.BlockSpec((tile_b, input_dim), lambda i: (i, 0))

    # Weights/biases: same (0, 0) block every grid step -> VMEM resident.
    resident = lambda a: pl.BlockSpec(a.shape, lambda i: (0, 0))

    flops = 2 * B * (input_dim * h1_dim + h1_dim * h2_dim + h2_dim * num_classes)
    bytes_accessed = (
        x.size * x.dtype.itemsize                   # f32 x read
        + B * num_classes * 4                       # f32 output write
        + (w1.size + w2.size + w3.size) * 2         # bf16 weights
        + (b1.size + b2.size + b3.size) * 4         # f32 biases
    )

    return pl.pallas_call(
        _mlp_kernel,
        out_shape=jax.ShapeDtypeStruct((B, num_classes), jnp.float32),
        grid=(num_tiles,),
        in_specs=[
            x_spec,
            resident(w1), resident(b1),
            resident(w2), resident(b2),
            resident(w3), resident(b3),
        ],
        out_specs=pl.BlockSpec((tile_b, num_classes), lambda i: (i, 0)),
        compiler_params=pltpu.CompilerParams(
            dimension_semantics=("parallel",),
        ),
        cost_estimate=pl.CostEstimate(
            flops=flops, transcendentals=0, bytes_accessed=bytes_accessed),
    )(x, w1, b1, w2, b2, w3, b3)


def init_params(key, input_dim, num_classes):
    """Deterministic init matching the module's layer shapes.

    Weights stored as (in_features, out_features) = transpose of PyTorch.
    """
    k1, k2, k3, k4, k5, k6 = jax.random.split(key, 6)

    def lin(kw, kb, fan_in, fan_out):
        bound = 1.0 / jnp.sqrt(fan_in)
        w = jax.random.uniform(kw, (fan_in, fan_out), jnp.float32, -bound, bound)
        b = jax.random.uniform(kb, (fan_out,), jnp.float32, -bound, bound)
        return w, b

    w1, b1 = lin(k1, k2, input_dim, 64)
    w2, b2 = lin(k3, k4, 64, 32)
    w3, b3 = lin(k5, k6, 32, num_classes)
    return (w1, b1, w2, b2, w3, b3)


def _reference_forward(x, params):
    """Pure-JAX reference using the identical bf16-input / f32-accumulate recipe."""
    w1, b1, w2, b2, w3, b3 = params
    h = jnp.dot(x.astype(jnp.bfloat16), w1.astype(jnp.bfloat16),
                preferred_element_type=jnp.float32) + b1
    h = jnp.maximum(h, 0.0)
    h = jnp.dot(h.astype(jnp.bfloat16), w2.astype(jnp.bfloat16),
                preferred_element_type=jnp.float32) + b2
    h = jnp.maximum(h, 0.0)
    return jnp.dot(h.astype(jnp.bfloat16), w3.astype(jnp.bfloat16),
                   preferred_element_type=jnp.float32) + b3


def _reference_forward_f32(x, params):
    w1, b1, w2, b2, w3, b3 = params
    h = jnp.maximum(x @ w1 + b1, 0.0)
    h = jnp.maximum(h @ w2 + b2, 0.0)
    return h @ w3 + b3


if __name__ == "__main__":
    key = jax.random.PRNGKey(0)
    kx, kx2, kx3, kp = jax.random.split(key, 4)

    input_dim = 32
    num_classes = 4
    params = init_params(kp, input_dim, num_classes)
    prepared = prepare_params(params)

    # --- Test 1: small batch (single grid step), check vs. bf16 and f32 refs.
    batch = 8
    x = jax.random.normal(kx, (batch, input_dim), dtype=jnp.float32)
    out = jax.block_until_ready(domain_classifier_forward(x, prepared))
    assert out.shape == (batch, num_classes)
    ref = _reference_forward(x, params)
    ref_f32 = _reference_forward_f32(x, params)
    assert jnp.allclose(out, ref, atol=1e-4, rtol=1e-4), \
        float(jnp.max(jnp.abs(out - ref)))
    assert jnp.allclose(out, ref_f32, atol=5e-2, rtol=5e-2), \
        float(jnp.max(jnp.abs(out - ref_f32)))

    # --- Test 2: batch not a multiple of the tile (partial last block, 2 tiles).
    batch2 = 20
    x2 = jax.random.normal(kx2, (batch2, input_dim), dtype=jnp.float32)
    out2 = jax.block_until_ready(domain_classifier_forward(x2, prepared))
    ref2 = _reference_forward(x2, params)
    assert out2.shape == (batch2, num_classes)
    assert jnp.allclose(out2, ref2, atol=1e-4, rtol=1e-4), \
        float(jnp.max(jnp.abs(out2 - ref2)))

    # --- Test 3: longer grid (exercises the 3-deep buffered x stream + masking).
    batch3 = 100
    x3 = jax.random.normal(kx3, (batch3, input_dim), dtype=jnp.float32)
    out3 = jax.block_until_ready(
        domain_classifier_forward(x3, prepared, tile_b=32))
    ref3 = _reference_forward(x3, params)
    assert out3.shape == (batch3, num_classes)
    assert jnp.allclose(out3, ref3, atol=1e-4, rtol=1e-4), \
        float(jnp.max(jnp.abs(out3 - ref3)))

    print("KERNEL_OK")
</pallas_src>

<mosaic_0001>
module attributes {stable_mosaic.version = 11 : i64} {
  func.func @_mlp_kernel(%arg0: i32, %arg1: memref<8x32xf32, #tpu.memory_space<vmem>>, %arg2: memref<32x64xbf16, #tpu.memory_space<vmem>>, %arg3: memref<1x64xf32, #tpu.memory_space<vmem>>, %arg4: memref<64x32xbf16, #tpu.memory_space<vmem>>, %arg5: memref<1x32xf32, #tpu.memory_space<vmem>>, %arg6: memref<32x4xbf16, #tpu.memory_space<vmem>>, %arg7: memref<1x4xf32, #tpu.memory_space<vmem>>, %arg8: memref<8x4xf32, #tpu.memory_space<vmem>>) attributes {dimension_semantics = [#tpu.dimension_semantics<parallel>], iteration_bounds = array<i64: 1>, scalar_prefetch = 0 : i64, scratch_operands = 0 : i64, tpu.core_type = #tpu.core_type<tc>, window_params = [{transform_indices = @transform_0, window_bounds = array<i64: 8, 32>}, {pipeline_mode = #tpu.pipeline_mode<synchronous>, transform_indices = @transform_1, window_bounds = array<i64: 32, 64>}, {pipeline_mode = #tpu.pipeline_mode<synchronous>, transform_indices = @transform_2, window_bounds = array<i64: 1, 64>}, {pipeline_mode = #tpu.pipeline_mode<synchronous>, transform_indices = @transform_3, window_bounds = array<i64: 64, 32>}, {pipeline_mode = #tpu.pipeline_mode<synchronous>, transform_indices = @transform_4, window_bounds = array<i64: 1, 32>}, {pipeline_mode = #tpu.pipeline_mode<synchronous>, transform_indices = @transform_5, window_bounds = array<i64: 32, 4>}, {pipeline_mode = #tpu.pipeline_mode<synchronous>, transform_indices = @transform_6, window_bounds = array<i64: 1, 4>}, {transform_indices = @transform_7, window_bounds = array<i64: 8, 4>}]} {
    %c0 = arith.constant 0 : index
    %c0_0 = arith.constant 0 : index
    %0 = vector.load %arg1[%c0, %c0_0] : memref<8x32xf32, #tpu.memory_space<vmem>>, vector<8x32xf32>
    %1 = arith.truncf %0 : vector<8x32xf32> to vector<8x32xbf16>
    %c0_1 = arith.constant 0 : index
    %c0_2 = arith.constant 0 : index
    %2 = vector.load %arg2[%c0_1, %c0_2] : memref<32x64xbf16, #tpu.memory_space<vmem>>, vector<32x64xbf16>
    %cst = arith.constant dense<0.000000e+00> : vector<8x64xf32>
    %3 = tpu.matmul %1, %2, %cst {dimension_numbers = #tpu.dot_dimension_numbers<[1], [0], [0], [1], [0, 0, 1, 1], [], []>} : vector<8x32xbf16>, vector<32x64xbf16>, vector<8x64xf32> -> vector<8x64xf32>
    %c0_3 = arith.constant 0 : index
    %c0_4 = arith.constant 0 : index
    %4 = vector.load %arg3[%c0_3, %c0_4] : memref<1x64xf32, #tpu.memory_space<vmem>>, vector<1x64xf32>
    %5 = vector.broadcast %4 : vector<1x64xf32> to vector<8x64xf32>
    %6 = arith.addf %3, %5 : vector<8x64xf32>
    %cst_5 = arith.constant 0.000000e+00 : f32
    %7 = vector.broadcast %cst_5 : f32 to vector<8x64xf32>
    %8 = arith.maximumf %6, %7 : vector<8x64xf32>
    %9 = arith.truncf %8 : vector<8x64xf32> to vector<8x64xbf16>
    %c0_6 = arith.constant 0 : index
    %c0_7 = arith.constant 0 : index
    %10 = vector.load %arg4[%c0_6, %c0_7] : memref<64x32xbf16, #tpu.memory_space<vmem>>, vector<64x32xbf16>
    %cst_8 = arith.constant dense<0.000000e+00> : vector<8x32xf32>
    %11 = tpu.matmul %9, %10, %cst_8 {dimension_numbers = #tpu.dot_dimension_numbers<[1], [0], [0], [1], [0, 0, 1, 1], [], []>} : vector<8x64xbf16>, vector<64x32xbf16>, vector<8x32xf32> -> vector<8x32xf32>
    %c0_9 = arith.constant 0 : index
    %c0_10 = arith.constant 0 : index
    %12 = vector.load %arg5[%c0_9, %c0_10] : memref<1x32xf32, #tpu.memory_space<vmem>>, vector<1x32xf32>
    %13 = vector.broadcast %12 : vector<1x32xf32> to vector<8x32xf32>
    %14 = arith.addf %11, %13 : vector<8x32xf32>
    %cst_11 = arith.constant 0.000000e+00 : f32
    %15 = vector.broadcast %cst_11 : f32 to vector<8x32xf32>
    %16 = arith.maximumf %14, %15 : vector<8x32xf32>
    %17 = arith.truncf %16 : vector<8x32xf32> to vector<8x32xbf16>
    %c0_12 = arith.constant 0 : index
    %c0_13 = arith.constant 0 : index
    %18 = vector.load %arg6[%c0_12, %c0_13] : memref<32x4xbf16, #tpu.memory_space<vmem>>, vector<32x4xbf16>
    %cst_14 = arith.constant dense<0.000000e+00> : vector<8x4xf32>
    %19 = tpu.matmul %17, %18, %cst_14 {dimension_numbers = #tpu.dot_dimension_numbers<[1], [0], [0], [1], [0, 0, 1, 1], [], []>} : vector<8x32xbf16>, vector<32x4xbf16>, vector<8x4xf32> -> vector<8x4xf32>
    %c0_15 = arith.constant 0 : index
    %c0_16 = arith.constant 0 : index
    %20 = vector.load %arg7[%c0_15, %c0_16] : memref<1x4xf32, #tpu.memory_space<vmem>>, vector<1x4xf32>
    %21 = vector.broadcast %20 : vector<1x4xf32> to vector<8x4xf32>
    %22 = arith.addf %19, %21 : vector<8x4xf32>
    %c0_17 = arith.constant 0 : index
    %c0_18 = arith.constant 0 : index
    %23 = vector.load %arg8[%c0_17, %c0_18] : memref<8x4xf32, #tpu.memory_space<vmem>>, vector<8x4xf32>
    tpu.vector_store %arg8[%c0_17, %c0_18], %22 {strides = array<i32>} : memref<8x4xf32, #tpu.memory_space<vmem>>, vector<8x4xf32>,
    return
  }
  func.func @transform_0(%arg0: i32) -> (i32, i32) {
    %c0_i32 = arith.constant 0 : i32
    %c0_i32_0 = arith.constant 0 : i32
    return %arg0, %c0_i32 : i32, i32
  }
  func.func @transform_1(%arg0: i32) -> (i32, i32) {
    %c0_i32 = arith.constant 0 : i32
    %c0_i32_0 = arith.constant 0 : i32
    %c0_i32_1 = arith.constant 0 : i32
    return %c0_i32, %c0_i32_0 : i32, i32
  }
  func.func @transform_2(%arg0: i32) -> (i32, i32) {
    %c0_i32 = arith.constant 0 : i32
    %c0_i32_0 = arith.constant 0 : i32
    %c0_i32_1 = arith.constant 0 : i32
    return %c0_i32, %c0_i32_0 : i32, i32
  }
  func.func @transform_3(%arg0: i32) -> (i32, i32) {
    %c0_i32 = arith.constant 0 : i32
    %c0_i32_0 = arith.constant 0 : i32
    %c0_i32_1 = arith.constant 0 : i32
    return %c0_i32, %c0_i32_0 : i32, i32
  }
  func.func @transform_4(%arg0: i32) -> (i32, i32) {
    %c0_i32 = arith.constant 0 : i32
    %c0_i32_0 = arith.constant 0 : i32
    %c0_i32_1 = arith.constant 0 : i32
    return %c0_i32, %c0_i32_0 : i32, i32
  }
  func.func @transform_5(%arg0: i32) -> (i32, i32) {
    %c0_i32 = arith.constant 0 : i32
    %c0_i32_0 = arith.constant 0 : i32
    %c0_i32_1 = arith.constant 0 : i32
    return %c0_i32, %c0_i32_0 : i32, i32
  }
  func.func @transform_6(%arg0: i32) -> (i32, i32) {
    %c0_i32 = arith.constant 0 : i32
    %c0_i32_0 = arith.constant 0 : i32
    %c0_i32_1 = arith.constant 0 : i32
    return %c0_i32, %c0_i32_0 : i32, i32
  }
  func.func @transform_7(%arg0: i32) -> (i32, i32) {
    %c0_i32 = arith.constant 0 : i32
    %c0_i32_0 = arith.constant 0 : i32
    return %arg0, %c0_i32 : i32, i32
  }
}

</mosaic_0001>

<llo_original>
// kernel: domain_classifier_forward.1
$region0: #{domain_classifier_forward.1}
  #allocation0 [shape = 'u32[]', space=smem, size = 0x4, offset = 0x4, fixed_abs, tag = 'smem constant byte address 0x4 - core index']
  #allocation1 [shape = 'u32[144,128]{1,0:T(1,128)}', space=vmem, size = 0x12000, scoped, tag = 'internal scratch']
  %s0 = inlined_call_operand.vmem [shape: f32[8,32], index: 0, kind: input, shape index: {}]
  %s1 = inlined_call_operand.vmem [shape: bf16[32,64], index: 1, kind: input, shape index: {}]
  %s2 = inlined_call_operand.vmem [shape: f32[1,64], index: 2, kind: input, shape index: {}]
  %s3 = inlined_call_operand.vmem [shape: bf16[64,32], index: 3, kind: input, shape index: {}]
  %s4 = inlined_call_operand.vmem [shape: f32[1,32], index: 4, kind: input, shape index: {}]
  %s5 = inlined_call_operand.vmem [shape: bf16[32,4], index: 5, kind: input, shape index: {}]
  %s6 = inlined_call_operand.vmem [shape: f32[1,4], index: 6, kind: input, shape index: {}]
  %s7 = inlined_call_operand.vmem [shape: f32[8,4], index: 7, kind: output, shape index: {}]
  %s8 = sld [smem:[#allocation0]]
  $region38: #{domain_classifier_forward.1} parent=0
    _
  %s10 = ssub.s32 1, %s8
  %s11 = scalar_select 0, %s10, %s8
  // Predicated region
  $region2: #{domain_classifier_forward.1} parent=0 // pred_check
    _
  $region3: #{domain_classifier_forward.1} parent=0 // pred_check_branch
    %13 = sbr.rel (0) target = $region5
  $region4: #{domain_classifier_forward.1} parent=0 // pred_region
    _
  $region5: #{domain_classifier_forward.1} parent=0 // pred_fallthru
    _
  // Predicated region
  $region6: #{domain_classifier_forward.1} parent=0 // pred_check
    _
  $region7: #{domain_classifier_forward.1} parent=0 // pred_check_branch
    %15 = sbr.rel (0) target = $region9
  $region8: #{domain_classifier_forward.1} parent=0 // pred_region
    _
  $region9: #{domain_classifier_forward.1} parent=0 // pred_fallthru
    _
  // Predicated region
  $region10: #{domain_classifier_forward.1} parent=0 // pred_check
    _
  $region11: #{domain_classifier_forward.1} parent=0 // pred_check_branch
    %17 = sbr.rel (0) target = $region13
  $region12: #{domain_classifier_forward.1} parent=0 // pred_region
    _
  $region13: #{domain_classifier_forward.1} parent=0 // pred_fallthru
    _
  // Predicated region
  $region14: #{domain_classifier_forward.1} parent=0 // pred_check
    _
  $region15: #{domain_classifier_forward.1} parent=0 // pred_check_branch
    %19 = sbr.rel (0) target = $region17
  $region16: #{domain_classifier_forward.1} parent=0 // pred_region
    _
  $region17: #{domain_classifier_forward.1} parent=0 // pred_fallthru
    _
  // Predicated region
  $region18: #{domain_classifier_forward.1} parent=0 // pred_check
    _
  $region19: #{domain_classifier_forward.1} parent=0 // pred_check_branch
    %21 = sbr.rel (0) target = $region21
  $region20: #{domain_classifier_forward.1} parent=0 // pred_region
    _
  $region21: #{domain_classifier_forward.1} parent=0 // pred_fallthru
    _
  // Predicated region
  $region22: #{domain_classifier_forward.1} parent=0 // pred_check
    _
  $region23: #{domain_classifier_forward.1} parent=0 // pred_check_branch
    %23 = sbr.rel (0) target = $region25
  $region24: #{domain_classifier_forward.1} parent=0 // pred_region
    _
  $region25: #{domain_classifier_forward.1} parent=0 // pred_fallthru
    _
  // Predicated region
  $region26: #{domain_classifier_forward.1} parent=0 // pred_check
    _
  $region27: #{domain_classifier_forward.1} parent=0 // pred_check_branch
    %25 = sbr.rel (0) target = $region29
  $region28: #{domain_classifier_forward.1} parent=0 // pred_region
    _
  $region29: #{domain_classifier_forward.1} parent=0 // pred_fallthru
    _
  %v27 = vld [vmem:[%s0] sm:$0xff]
  %v28 = vpack.c.bf16 %v27, %v27
  %v29 = vld [vmem:[%s1] sm:$0xf]
  %v30 = vld [vmem:[%s1 + $0x4] sm:$0xf]
  %v31 = vld [vmem:[%s1 + $0x8] sm:$0xf]
  %v32 = vld [vmem:[%s1 + $0xc] sm:$0xf]
  %v33 = vld [vmem:[%s2] sm:$0x1]
  %v35 = vlaneseq
  %v36 = vshrl.u32 %v35, 7
  %v37 = vsub.s32 0, %v36
  %v38 = vrot.slane %v33, %v37
  %v44 = vunpack.c.l.b16 %v29
  %v45 = vunpack.c.l.b16 %v30
  %v46 = vunpack.c.l.b16 %v31
  %v47 = vunpack.c.l.b16 %v32
  %v48 = vpack.c.b16 %v45, %v44
  %v49 = vpack.c.b16 %v47, %v46
  %vm52 = vcmask 261120
  %v54 = vsel %vm52, %v28, 0
  %56 = vmatprep.subr.bf16.mxu0 0
  %57 = vmatpush1.bf16.msra.mxu0 %v48
  %58 = vmatprep.subr.bf16.mxu0 0
  %59 = vmatpush1.bf16.msra.mxu0 %v49
  %60 = vmatprep.subr.bf16.mxu0 0
  %61 = vmatpush1.bf16.msra.mxu0 0
  %62 = vmatprep.subr.bf16.mxu0 0
  %63 = vmatpush1.bf16.msra.mxu0 0
  %64 = vmatprep.subr.bf16.mxu0 0
  %65 = vmatpush1.bf16.msra.mxu0 0
  %66 = vmatprep.subr.bf16.mxu0 0
  %67 = vmatpush1.bf16.msra.mxu0 0
  %68 = vmatprep.subr.bf16.mxu0 0
  %69 = vmatpush1.bf16.msra.mxu0 0
  %70 = vmatprep.subr.bf16.mxu0 0
  %71 = vmatpush1.bf16.msra.mxu0 0
  %72 = vmatprep.subr.bf16.mxu0 0
  %73 = vmatpush1.bf16.msra.mxu0 0
  %74 = vmatprep.subr.bf16.mxu0 0
  %75 = vmatpush1.bf16.msra.mxu0 0
  %76 = vmatprep.subr.bf16.mxu0 0
  %77 = vmatpush1.bf16.msra.mxu0 0
  %78 = vmatprep.subr.bf16.mxu0 0
  %79 = vmatpush1.bf16.msra.mxu0 0
  %80 = vmatprep.subr.bf16.mxu0 0
  %81 = vmatpush1.bf16.msra.mxu0 0
  %82 = vmatprep.subr.bf16.mxu0 0
  %83 = vmatpush1.bf16.msra.mxu0 0
  %84 = vmatprep.subr.bf16.mxu0 0
  %85 = vmatpush1.bf16.msra.mxu0 0
  %86 = vmatprep.subr.bf16.mxu0 0
  %87 = vmatpush1.bf16.msra.mxu0 0
  %88 = vmatprep.mubr.bf16.mxu0 0
  %89 = vmatmul.mubr.bf16.gmra.mrb[0].mxu0 %v54
  %v90 = vpop.f32.mrb[0].mxu0
  %v91 = vadd.f32 %v38, %v90
  %v92 = vpop.f32.mrb[0].mxu0
  %v93 = vpop.f32.mrb[0].mxu0
  %v94 = vpop.f32.mrb[0].mxu0
  %95 = vdwg.mxu0
  %v96 = vmax.f32 %v91, 0.0
  %v97 = vpack.c.bf16 %v96, %v96
  %v98 = vld [vmem:[%s3] sm:$0xf]
  %v99 = vld [vmem:[%s3 + $0x4] sm:$0xf]
  %v100 = vld [vmem:[%s3 + $0x8] sm:$0xf]
  %v101 = vld [vmem:[%s3 + $0xc] sm:$0xf]
  %v102 = vld [vmem:[%s3 + $0x10] sm:$0xf]
  %v103 = vld [vmem:[%s3 + $0x14] sm:$0xf]
  %v104 = vld [vmem:[%s3 + $0x18] sm:$0xf]
  %v105 = vld [vmem:[%s3 + $0x1c] sm:$0xf]
  %v106 = vld [vmem:[%s4] sm:$0x1]
  %v108 = vlaneseq
  %v109 = vshrl.u32 %v108, 7
  %v110 = vsub.s32 0, %v109
  %v111 = vrot.slane %v106, %v110
  %v121 = vunpack.c.l.b16 %v98
  %v122 = vunpack.c.l.b16 %v99
  %v123 = vunpack.c.l.b16 %v100
  %v124 = vunpack.c.l.b16 %v101
  %v125 = vunpack.c.l.b16 %v102
  %v126 = vunpack.c.l.b16 %v103
  %v127 = vunpack.c.l.b16 %v104
  %v128 = vunpack.c.l.b16 %v105
  %v129 = vpack.c.b16 %v122, %v121
  %v130 = vpack.c.b16 %v124, %v123
  %v131 = vpack.c.b16 %v126, %v125
  %v132 = vpack.c.b16 %v128, %v127
  %vm137 = vcmask 523264
  %v139 = vsel %vm137, %v97, 0
  %141 = vmatprep.subr.bf16.mxu0 0
  %142 = vmatpush1.bf16.msra.mxu0 %v129
  %143 = vmatprep.subr.bf16.mxu0 0
  %144 = vmatpush1.bf16.msra.mxu0 %v130
  %145 = vmatprep.subr.bf16.mxu0 0
  %146 = vmatpush1.bf16.msra.mxu0 %v131
  %147 = vmatprep.subr.bf16.mxu0 0
  %148 = vmatpush1.bf16.msra.mxu0 %v132
  %149 = vmatprep.subr.bf16.mxu0 0
  %150 = vmatpush1.bf16.msra.mxu0 0
  %151 = vmatprep.subr.bf16.mxu0 0
  %152 = vmatpush1.bf16.msra.mxu0 0
  %153 = vmatprep.subr.bf16.mxu0 0
  %154 = vmatpush1.bf16.msra.mxu0 0
  %155 = vmatprep.subr.bf16.mxu0 0
  %156 = vmatpush1.bf16.msra.mxu0 0
  %157 = vmatprep.subr.bf16.mxu0 0
  %158 = vmatpush1.bf16.msra.mxu0 0
  %159 = vmatprep.subr.bf16.mxu0 0
  %160 = vmatpush1.bf16.msra.mxu0 0
  %161 = vmatprep.subr.bf16.mxu0 0
  %162 = vmatpush1.bf16.msra.mxu0 0
  %163 = vmatprep.subr.bf16.mxu0 0
  %164 = vmatpush1.bf16.msra.mxu0 0
  %165 = vmatprep.subr.bf16.mxu0 0
  %166 = vmatpush1.bf16.msra.mxu0 0
  %167 = vmatprep.subr.bf16.mxu0 0
  %168 = vmatpush1.bf16.msra.mxu0 0
  %169 = vmatprep.subr.bf16.mxu0 0
  %170 = vmatpush1.bf16.msra.mxu0 0
  %171 = vmatprep.subr.bf16.mxu0 0
  %172 = vmatpush1.bf16.msra.mxu0 0
  %173 = vmatprep.mubr.bf16.mxu0 0
  %174 = vmatmul.mubr.bf16.gmra.mrb[0].mxu0 %v139
  %v175 = vpop.f32.mrb[0].mxu0
  %v176 = vadd.f32 %v111, %v175
  %v177 = vpop.f32.mrb[0].mxu0
  %v178 = vpop.f32.mrb[0].mxu0
  %v179 = vpop.f32.mrb[0].mxu0
  %180 = vdwg.mxu0
  %v181 = vmax.f32 %v176, 0.0
  %v182 = vpack.c.bf16 %v181, %v181
  %v183 = vld [vmem:[%s5] sm:$0xf]
  %v184 = vld [vmem:[%s5 + $0x4] sm:$0xf]
  %v185 = vld [vmem:[%s5 + $0x8] sm:$0xf]
  %v186 = vld [vmem:[%s5 + $0xc] sm:$0xf]
  %v187 = vld [vmem:[%s6] sm:$0x1]
  %v189 = vlaneseq
  %v190 = vshrl.u32 %v189, 7
  %v191 = vsub.s32 0, %v190
  %v192 = vrot.slane %v187, %v191
  %v198 = vunpack.c.l.b16 %v183
  %v199 = vunpack.c.l.b16 %v184
  %v200 = vunpack.c.l.b16 %v185
  %v201 = vunpack.c.l.b16 %v186
  %v202 = vpack.c.b16 %v199, %v198
  %v203 = vpack.c.b16 %v201, %v200
  %v207 = vsel %vm52, %v182, 0
  %209 = vmatprep.subr.bf16.mxu0 0
  %210 = vmatpush1.bf16.msra.mxu0 %v202
  %211 = vmatprep.subr.bf16.mxu0 0
  %212 = vmatpush1.bf16.msra.mxu0 %v203
  %213 = vmatprep.subr.bf16.mxu0 0
  %214 = vmatpush1.bf16.msra.mxu0 0
  %215 = vmatprep.subr.bf16.mxu0 0
  %216 = vmatpush1.bf16.msra.mxu0 0
  %217 = vmatprep.subr.bf16.mxu0 0
  %218 = vmatpush1.bf16.msra.mxu0 0
  %219 = vmatprep.subr.bf16.mxu0 0
  %220 = vmatpush1.bf16.msra.mxu0 0
  %221 = vmatprep.subr.bf16.mxu0 0
  %222 = vmatpush1.bf16.msra.mxu0 0
  %223 = vmatprep.subr.bf16.mxu0 0
  %224 = vmatpush1.bf16.msra.mxu0 0
  %225 = vmatprep.subr.bf16.mxu0 0
  %226 = vmatpush1.bf16.msra.mxu0 0
  %227 = vmatprep.subr.bf16.mxu0 0
  %228 = vmatpush1.bf16.msra.mxu0 0
  %229 = vmatprep.subr.bf16.mxu0 0
  %230 = vmatpush1.bf16.msra.mxu0 0
  %231 = vmatprep.subr.bf16.mxu0 0
  %232 = vmatpush1.bf16.msra.mxu0 0
  %233 = vmatprep.subr.bf16.mxu0 0
  %234 = vmatpush1.bf16.msra.mxu0 0
  %235 = vmatprep.subr.bf16.mxu0 0
  %236 = vmatpush1.bf16.msra.mxu0 0
  %237 = vmatprep.subr.bf16.mxu0 0
  %238 = vmatpush1.bf16.msra.mxu0 0
  %239 = vmatprep.subr.bf16.mxu0 0
  %240 = vmatpush1.bf16.msra.mxu0 0
  %241 = vmatprep.mubr.bf16.mxu0 0
  %242 = vmatmul.mubr.bf16.gmra.mrb[0].mxu0 %v207
  %v243 = vpop.f32.mrb[0].mxu0
  %v244 = vadd.f32 %v192, %v243
  %v245 = vpop.f32.mrb[0].mxu0
  %v246 = vpop.f32.mrb[0].mxu0
  %v247 = vpop.f32.mrb[0].mxu0
  %248 = vdwg.mxu0
  %vm249 = vcmask 31744
  %250 = vst.msk [vmem:[%s7] sm:$0xff] %vm249, %v244
  // Predicated region
  $region30: #{domain_classifier_forward.1} parent=0 // pred_check
    _
  $region31: #{domain_classifier_forward.1} parent=0 // pred_check_branch
    %252 = sbr.rel (0) target = $region33
  $region32: #{domain_classifier_forward.1} parent=0 // pred_region
    _
  $region33: #{domain_classifier_forward.1} parent=0 // pred_fallthru
    _
  // Predicated region
  $region34: #{domain_classifier_forward.1} parent=0 // pred_check
    _
  $region35: #{domain_classifier_forward.1} parent=0 // pred_check_branch
    %254 = sbr.rel (0) target = $region37
  $region36: #{domain_classifier_forward.1} parent=0 // pred_region
    _
  $region37: #{domain_classifier_forward.1} parent=0 // pred_fallthru
    _

</llo_original>
